<compile_context>
chip_gen: v5e
topology: v5e:2x2
jax: 0.10.0
libtpu: 0.0.40
codegen_flags: <defaults>
</compile_context>

<pallas_src>
import jax
import jax.numpy as jnp
from jax.experimental import pallas as pl
from jax.experimental.pallas import tpu as pltpu


def _pam_kernel(gamma_ref, x_ref, xq_ref, wq_ref, bq_ref, wk_ref, bk_ref,
                wv_ref, bv_ref, o_ref, k_sc, v_sc):
    qi = pl.program_id(1)

    # --- once per image: key / value projections into resident VMEM scratch -------
    @pl.when(qi == 0)
    def _():
        x = x_ref[...]                                                   # (C, N) f32
        k = jnp.dot(wk_ref[...], x, preferred_element_type=jnp.float32) + bk_ref[...]
        v = jnp.dot(wv_ref[...], x, preferred_element_type=jnp.float32) + bv_ref[...]
        k_sc[...] = k.astype(k_sc.dtype)                                 # (Cq, N) bf16
        v_sc[...] = v.astype(v_sc.dtype)                                 # (C,  N) bf16

    # --- per query tile ------------------------------------------------------------
    x_q = xq_ref[...]                                                    # (C, TQ) f32
    q = jnp.dot(wq_ref[...], x_q, preferred_element_type=jnp.float32) + bq_ref[...]
    # (Cq, TQ) -> (TQ, Cq): one small vreg-tile transpose so both big matmuls are
    # plain NN / NT forms for the MXU.  bf16 operands, f32 accumulation.
    q_t = jnp.transpose(q).astype(jnp.bfloat16)

    # energy[i, j] = sum_c q[c, i] * k[c, j]
    energy = jnp.dot(q_t, k_sc[...], preferred_element_type=jnp.float32)  # (TQ, N)

    # numerically stable softmax over the key axis; normalisation deferred
    m = jnp.max(energy, axis=-1, keepdims=True)                          # (TQ, 1)
    p = jnp.exp(energy - m)                                              # (TQ, N)

    # out[c, i] = sum_j v[c, j] * p[i, j]   (NT matmul, lane-dense (C, TQ) result)
    out = jax.lax.dot_general(v_sc[...], p.astype(jnp.bfloat16),
                              (((1,), (1,)), ((), ())),
                              preferred_element_type=jnp.float32)        # (C, TQ)

    # Row sums of p delivered directly as a (1, TQ) row vector (same NT matmul form,
    # avoids a (TQ, 1) -> (1, TQ) relayout); reciprocal on the EUP.
    ones_row = jnp.ones((1, p.shape[-1]), jnp.float32)
    s_row = jax.lax.dot_general(ones_row, p, (((1,), (1,)), ((), ())),
                                preferred_element_type=jnp.float32)      # (1, TQ)
    inv_s = pl.reciprocal(s_row, approx=True)

    gamma = gamma_ref[0, 0]
    o_ref[...] = (gamma * (out * inv_s) + x_q).astype(o_ref.dtype)


def _pick_tq(n):
    for t in (512, 256, 128):
        if n % t == 0:
            return t
    return n


def pam_module(x, wq, bq, wk, bk, wv, bv, gamma, *, tq=None):
    """Fused PAM forward for NCHW x; 1x1-conv weights given as (Cout, Cin)."""
    B, C, H, W = x.shape                      # C assumed a multiple of 8 (true for DANet)
    N = H * W
    cq = wq.shape[0]
    if tq is None or N % tq != 0:
        tq = _pick_tq(N)
    n_q = N // tq

    # Channels-first (B, C, N): a free reshape, N stays on lanes.  No transposes.
    x_cn = x.reshape(B, C, N)

    # Pad the query/key channel dim to a multiple of 8 sublanes with zero rows
    # (zero rows contribute exactly 0 to the energy) so the small q transpose and
    # the K scratch are cleanly tiled.
    cq_p = max(8, ((cq + 7) // 8) * 8)
    f32 = jnp.float32
    wq_p = jnp.zeros((cq_p, C), f32).at[:cq].set(wq.astype(f32))
    wk_p = jnp.zeros((cq_p, C), f32).at[:cq].set(wk.astype(f32))
    bq_p = jnp.zeros((cq_p, 1), f32).at[:cq, 0].set(bq.astype(f32))
    bk_p = jnp.zeros((cq_p, 1), f32).at[:cq, 0].set(bk.astype(f32))
    wv_f = wv.astype(f32)
    bv_c = bv.astype(f32).reshape(C, 1)
    gamma_arr = jnp.asarray(gamma, f32).reshape(1, 1)

    # Explicit VMEM budget: double-buffered blocks + resident K/V scratch + (TQ, N)
    # energy/p tiles.  Clamped to v7x's 64 MiB physical VMEM (v5e/v6e have 128 MiB).
    vmem_bytes = (2 * (C * N + 2 * C * tq) * 4        # x, x_tile, out blocks (x2 bufs)
                  + (cq_p + C) * N * 2                # K/V scratch (bf16)
                  + 4 * tq * N * 4                    # energy / p / temporaries
                  + (2 * cq_p * C + C * C) * 4
                  + (2 << 20))                        # headroom
    vmem_limit = int(min(max(vmem_bytes, 32 << 20), 64 << 20))

    flops = 2 * B * (N * C * (2 * cq_p + C) + N * N * (cq_p + C))
    cost = pl.CostEstimate(
        flops=flops,
        transcendentals=B * N * (N + 1),
        bytes_accessed=4 * (3 * B * C * N + 2 * cq_p * C + C * C + 2 * cq_p + C))

    grid_spec = pltpu.PrefetchScalarGridSpec(
        num_scalar_prefetch=0,
        grid=(B, n_q),
        in_specs=[
            pl.BlockSpec(memory_space=pltpu.MemorySpace.SMEM),      # gamma scalar
            pl.BlockSpec((None, C, N), lambda b, i: (b, 0, 0)),     # x, full image
            pl.BlockSpec((None, C, tq), lambda b, i: (b, 0, i)),    # x, query tile
            pl.BlockSpec((cq_p, C), lambda b, i: (0, 0)),           # Wq (padded)
            pl.BlockSpec((cq_p, 1), lambda b, i: (0, 0)),           # bq
            pl.BlockSpec((cq_p, C), lambda b, i: (0, 0)),           # Wk (padded)
            pl.BlockSpec((cq_p, 1), lambda b, i: (0, 0)),           # bk
            pl.BlockSpec((C, C), lambda b, i: (0, 0)),              # Wv
            pl.BlockSpec((C, 1), lambda b, i: (0, 0)),              # bv
        ],
        out_specs=pl.BlockSpec((None, C, tq), lambda b, i: (b, 0, i)),
        scratch_shapes=[
            pltpu.VMEM((cq_p, N), jnp.bfloat16),                    # K, per image
            pltpu.VMEM((C, N), jnp.bfloat16),                       # V, per image
        ],
    )

    out_cn = pl.pallas_call(
        _pam_kernel,
        out_shape=jax.ShapeDtypeStruct((B, C, N), x.dtype),
        grid_spec=grid_spec,
        compiler_params=pltpu.CompilerParams(
            # query-tile axis carries the per-image K/V scratch -> "arbitrary";
            # batch axis is independent -> "parallel" (megacore sharding on v7x).
            dimension_semantics=("parallel", "arbitrary"),
            vmem_limit_bytes=vmem_limit,
        ),
        cost_estimate=cost,
    )(gamma_arr, x_cn, x_cn, wq_p, bq_p, wk_p, bk_p, wv_f, bv_c)

    return out_cn.reshape(B, C, H, W)


def _pam_reference(x, wq, bq, wk, bk, wv, bv, gamma):
    """Pure-JAX reference mirroring the PyTorch forward exactly."""
    B, C, H, W = x.shape
    N = H * W
    xf = x.reshape(B, C, N).astype(jnp.float32)
    hp = jax.lax.Precision.HIGHEST
    q = jnp.einsum("oc,bcn->bon", wq, xf, precision=hp) + bq[None, :, None]
    k = jnp.einsum("oc,bcn->bon", wk, xf, precision=hp) + bk[None, :, None]
    v = jnp.einsum("oc,bcn->bon", wv, xf, precision=hp) + bv[None, :, None]
    energy = jnp.einsum("bci,bcj->bij", q, k, precision=hp)          # (B, N, N)
    attn = jax.nn.softmax(energy, axis=-1)
    out = jnp.einsum("bcj,bij->bci", v, attn, precision=hp)          # (B, C, N)
    out = out.reshape(B, C, H, W)
    return (gamma * out + xf.reshape(B, C, H, W)).astype(x.dtype)


if __name__ == "__main__":
    key = jax.random.PRNGKey(0)
    kx, k1, k2, k3, k4, k5, k6 = jax.random.split(key, 7)

    B, C, H, W = 2, 32, 16, 16      # in_dim=32 -> query/key channels = 32 // 8 = 4
    Cq = C // 8

    x = jax.random.normal(kx, (B, C, H, W), dtype=jnp.float32)
    wq = jax.random.normal(k1, (Cq, C), dtype=jnp.float32) * 0.1
    bq = jax.random.normal(k2, (Cq,), dtype=jnp.float32) * 0.1
    wk = jax.random.normal(k3, (Cq, C), dtype=jnp.float32) * 0.1
    bk = jax.random.normal(k4, (Cq,), dtype=jnp.float32) * 0.1
    wv = jax.random.normal(k5, (C, C), dtype=jnp.float32) * 0.1
    bv = jax.random.normal(k6, (C,), dtype=jnp.float32) * 0.1
    gamma = jnp.float32(0.5)        # torch inits gamma=0; nonzero exercises attention

    # tq=128 -> 2 query tiles per image: exercises the resident-K/V reuse path.
    out = pam_module(x, wq, bq, wk, bk, wv, bv, gamma, tq=128)
    out = jax.block_until_ready(out)

    ref = _pam_reference(x, wq, bq, wk, bk, wv, bv, gamma)

    assert out.shape == x.shape, out.shape
    assert out.dtype == x.dtype, out.dtype
    # Tolerance accounts for bf16 MXU operands (f32 accumulation) vs the
    # Precision.HIGHEST f32 reference; observed max abs err is ~1e-3.
    assert bool(jnp.allclose(out, ref, rtol=2e-3, atol=5e-3)), (
        "max abs err = %f" % float(jnp.max(jnp.abs(out - ref))))

    print("KERNEL_OK")
</pallas_src>

<mosaic_0001>
module attributes {stable_mosaic.version = 11 : i64} {
  func.func @_pam_kernel(%arg0: i32, %arg1: i32, %arg2: memref<1x1xf32, #tpu.memory_space<smem>>, %arg3: memref<1x32x256xf32, #tpu.memory_space<vmem>>, %arg4: memref<1x32x128xf32, #tpu.memory_space<vmem>>, %arg5: memref<8x32xf32, #tpu.memory_space<vmem>>, %arg6: memref<8x1xf32, #tpu.memory_space<vmem>>, %arg7: memref<8x32xf32, #tpu.memory_space<vmem>>, %arg8: memref<8x1xf32, #tpu.memory_space<vmem>>, %arg9: memref<32x32xf32, #tpu.memory_space<vmem>>, %arg10: memref<32x1xf32, #tpu.memory_space<vmem>>, %arg11: memref<1x32x128xf32, #tpu.memory_space<vmem>>, %arg12: memref<8x256xbf16, #tpu.memory_space<vmem>>, %arg13: memref<32x256xbf16, #tpu.memory_space<vmem>>) attributes {dimension_semantics = [#tpu.dimension_semantics<parallel>, #tpu.dimension_semantics<arbitrary>], iteration_bounds = array<i64: 2, 2>, scalar_prefetch = 0 : i64, scratch_operands = 2 : i64, tpu.core_type = #tpu.core_type<tc>, window_params = [{transform_indices = @transform_0, window_bounds = array<i64: 1, 1>}, {transform_indices = @transform_1, window_bounds = array<i64: 1, 32, 256>}, {transform_indices = @transform_2, window_bounds = array<i64: 1, 32, 128>}, {pipeline_mode = #tpu.pipeline_mode<synchronous>, transform_indices = @transform_3, window_bounds = array<i64: 8, 32>}, {pipeline_mode = #tpu.pipeline_mode<synchronous>, transform_indices = @transform_4, window_bounds = array<i64: 8, 1>}, {pipeline_mode = #tpu.pipeline_mode<synchronous>, transform_indices = @transform_5, window_bounds = array<i64: 8, 32>}, {pipeline_mode = #tpu.pipeline_mode<synchronous>, transform_indices = @transform_6, window_bounds = array<i64: 8, 1>}, {pipeline_mode = #tpu.pipeline_mode<synchronous>, transform_indices = @transform_7, window_bounds = array<i64: 32, 32>}, {pipeline_mode = #tpu.pipeline_mode<synchronous>, transform_indices = @transform_8, window_bounds = array<i64: 32, 1>}, {transform_indices = @transform_9, window_bounds = array<i64: 1, 32, 128>}]} {
    %c0_i32 = arith.constant 0 : i32
    %0 = arith.cmpi eq, %arg1, %c0_i32 : i32
    %1 = arith.extui %0 : i1 to i32
    %c0_i32_0 = arith.constant 0 : i32
    %2 = arith.cmpi ne, %1, %c0_i32_0 : i32
    scf.if %2 {
      %c0_21 = arith.constant 0 : index
      %c0_22 = arith.constant 0 : index
      %c0_23 = arith.constant 0 : index
      %34 = vector.load %arg3[%c0_21, %c0_22, %c0_23] : memref<1x32x256xf32, #tpu.memory_space<vmem>>, vector<1x32x256xf32>
      %35 = vector.shape_cast %34 : vector<1x32x256xf32> to vector<32x256xf32>
      %c0_24 = arith.constant 0 : index
      %c0_25 = arith.constant 0 : index
      %36 = vector.load %arg7[%c0_24, %c0_25] : memref<8x32xf32, #tpu.memory_space<vmem>>, vector<8x32xf32>
      %cst_26 = arith.constant dense<0.000000e+00> : vector<8x256xf32>
      %37 = tpu.matmul %36, %35, %cst_26 {dimension_numbers = #tpu.dot_dimension_numbers<[1], [0], [0], [1], [0, 0, 1, 1], [], []>} : vector<8x32xf32>, vector<32x256xf32>, vector<8x256xf32> -> vector<8x256xf32>
      %c0_27 = arith.constant 0 : index
      %c0_28 = arith.constant 0 : index
      %38 = vector.load %arg8[%c0_27, %c0_28] : memref<8x1xf32, #tpu.memory_space<vmem>>, vector<8x1xf32>
      %39 = vector.broadcast %38 : vector<8x1xf32> to vector<8x256xf32>
      %40 = arith.addf %37, %39 : vector<8x256xf32>
      %c0_29 = arith.constant 0 : index
      %c0_30 = arith.constant 0 : index
      %41 = vector.load %arg9[%c0_29, %c0_30] : memref<32x32xf32, #tpu.memory_space<vmem>>, vector<32x32xf32>
      %cst_31 = arith.constant dense<0.000000e+00> : vector<32x256xf32>
      %42 = tpu.matmul %41, %35, %cst_31 {dimension_numbers = #tpu.dot_dimension_numbers<[1], [0], [0], [1], [0, 0, 1, 1], [], []>} : vector<32x32xf32>, vector<32x256xf32>, vector<32x256xf32> -> vector<32x256xf32>
      %c0_32 = arith.constant 0 : index
      %c0_33 = arith.constant 0 : index
      %43 = vector.load %arg10[%c0_32, %c0_33] : memref<32x1xf32, #tpu.memory_space<vmem>>, vector<32x1xf32>
      %44 = vector.broadcast %43 : vector<32x1xf32> to vector<32x256xf32>
      %45 = arith.addf %42, %44 : vector<32x256xf32>
      %46 = arith.truncf %40 : vector<8x256xf32> to vector<8x256xbf16>
      %c0_34 = arith.constant 0 : index
      %c0_35 = arith.constant 0 : index
      %47 = vector.load %arg12[%c0_34, %c0_35] : memref<8x256xbf16, #tpu.memory_space<vmem>>, vector<8x256xbf16>
      tpu.vector_store %arg12[%c0_34, %c0_35], %46 {strides = array<i32>} : memref<8x256xbf16, #tpu.memory_space<vmem>>, vector<8x256xbf16>,
      %48 = arith.truncf %45 : vector<32x256xf32> to vector<32x256xbf16>
      %c0_36 = arith.constant 0 : index
      %c0_37 = arith.constant 0 : index
      %49 = vector.load %arg13[%c0_36, %c0_37] : memref<32x256xbf16, #tpu.memory_space<vmem>>, vector<32x256xbf16>
      tpu.vector_store %arg13[%c0_36, %c0_37], %48 {strides = array<i32>} : memref<32x256xbf16, #tpu.memory_space<vmem>>, vector<32x256xbf16>,
    } else {
    }
    %c0 = arith.constant 0 : index
    %c0_1 = arith.constant 0 : index
    %c0_2 = arith.constant 0 : index
    %3 = vector.load %arg4[%c0, %c0_1, %c0_2] : memref<1x32x128xf32, #tpu.memory_space<vmem>>, vector<1x32x128xf32>
    %4 = vector.shape_cast %3 : vector<1x32x128xf32> to vector<32x128xf32>
    %c0_3 = arith.constant 0 : index
    %c0_4 = arith.constant 0 : index
    %5 = vector.load %arg5[%c0_3, %c0_4] : memref<8x32xf32, #tpu.memory_space<vmem>>, vector<8x32xf32>
    %cst = arith.constant dense<0.000000e+00> : vector<8x128xf32>
    %6 = tpu.matmul %5, %4, %cst {dimension_numbers = #tpu.dot_dimension_numbers<[1], [0], [0], [1], [0, 0, 1, 1], [], []>} : vector<8x32xf32>, vector<32x128xf32>, vector<8x128xf32> -> vector<8x128xf32>
    %c0_5 = arith.constant 0 : index
    %c0_6 = arith.constant 0 : index
    %7 = vector.load %arg6[%c0_5, %c0_6] : memref<8x1xf32, #tpu.memory_space<vmem>>, vector<8x1xf32>
    %8 = vector.broadcast %7 : vector<8x1xf32> to vector<8x128xf32>
    %9 = arith.addf %6, %8 : vector<8x128xf32>
    %10 = tpu.transpose %9, [1, 0] : vector<8x128xf32> -> vector<128x8xf32>
    %11 = arith.truncf %10 : vector<128x8xf32> to vector<128x8xbf16>
    %c0_7 = arith.constant 0 : index
    %c0_8 = arith.constant 0 : index
    %12 = vector.load %arg12[%c0_7, %c0_8] : memref<8x256xbf16, #tpu.memory_space<vmem>>, vector<8x256xbf16>
    %cst_9 = arith.constant dense<0.000000e+00> : vector<128x256xf32>
    %13 = tpu.matmul %11, %12, %cst_9 {dimension_numbers = #tpu.dot_dimension_numbers<[1], [0], [0], [1], [0, 0, 1, 1], [], []>} : vector<128x8xbf16>, vector<8x256xbf16>, vector<128x256xf32> -> vector<128x256xf32>
    %cst_10 = arith.constant dense<0xFF800000> : vector<128xf32>
    %14 = vector.multi_reduction <maximumf>, %13, %cst_10 [1] : vector<128x256xf32> to vector<128xf32>
    %15 = vector.shape_cast %14 : vector<128xf32> to vector<128x1xf32>
    %16 = vector.broadcast %15 : vector<128x1xf32> to vector<128x256xf32>
    %17 = arith.subf %13, %16 : vector<128x256xf32>
    %18 = math.exp %17 : vector<128x256xf32>
    %c0_11 = arith.constant 0 : index
    %c0_12 = arith.constant 0 : index
    %19 = vector.load %arg13[%c0_11, %c0_12] : memref<32x256xbf16, #tpu.memory_space<vmem>>, vector<32x256xbf16>
    %20 = arith.truncf %18 : vector<128x256xf32> to vector<128x256xbf16>
    %cst_13 = arith.constant dense<0.000000e+00> : vector<32x128xf32>
    %21 = tpu.matmul %19, %20, %cst_13 {dimension_numbers = #tpu.dot_dimension_numbers<[1], [1], [0], [0], [0, 0, 1, 0], [], []>} : vector<32x256xbf16>, vector<128x256xbf16>, vector<32x128xf32> -> vector<32x128xf32>
    %cst_14 = arith.constant 1.000000e+00 : f32
    %22 = vector.broadcast %cst_14 : f32 to vector<1x256xf32>
    %cst_15 = arith.constant dense<0.000000e+00> : vector<1x128xf32>
    %23 = tpu.matmul %22, %18, %cst_15 {dimension_numbers = #tpu.dot_dimension_numbers<[1], [1], [0], [0], [0, 0, 1, 0], [], []>} : vector<1x256xf32>, vector<128x256xf32>, vector<1x128xf32> -> vector<1x128xf32>
    %24 = tpu.reciprocal %23 {approx = true} : vector<1x128xf32> -> vector<1x128xf32>
    %c0_16 = arith.constant 0 : index
    %c0_17 = arith.constant 0 : index
    %25 = memref.load %arg2[%c0_16, %c0_17] : memref<1x1xf32, #tpu.memory_space<smem>>
    %26 = vector.broadcast %24 : vector<1x128xf32> to vector<32x128xf32>
    %27 = arith.mulf %21, %26 : vector<32x128xf32>
    %28 = vector.broadcast %25 : f32 to vector<32x128xf32>
    %29 = arith.mulf %28, %27 : vector<32x128xf32>
    %30 = arith.addf %29, %4 : vector<32x128xf32>
    %c0_18 = arith.constant 0 : index
    %c0_19 = arith.constant 0 : index
    %c0_20 = arith.constant 0 : index
    %31 = vector.load %arg11[%c0_18, %c0_19, %c0_20] : memref<1x32x128xf32, #tpu.memory_space<vmem>>, vector<1x32x128xf32>
    %32 = vector.shape_cast %31 : vector<1x32x128xf32> to vector<32x128xf32>
    %33 = vector.shape_cast %30 : vector<32x128xf32> to vector<1x32x128xf32>
    tpu.vector_store %arg11[%c0_18, %c0_19, %c0_20], %33 {strides = array<i32>} : memref<1x32x128xf32, #tpu.memory_space<vmem>>, vector<1x32x128xf32>,
    return
  }
  func.func @transform_0(%arg0: i32, %arg1: i32) -> (i32, i32) {
    %c0_i32 = arith.constant 0 : i32
    %c0_i32_0 = arith.constant 0 : i32
    %c0_i32_1 = arith.constant 0 : i32
    return %c0_i32, %c0_i32_0 : i32, i32
  }
  func.func @transform_1(%arg0: i32, %arg1: i32) -> (i32, i32, i32) {
    %c0_i32 = arith.constant 0 : i32
    %c0_i32_0 = arith.constant 0 : i32
    %c0_i32_1 = arith.constant 0 : i32
    return %arg0, %c0_i32, %c0_i32_0 : i32, i32, i32
  }
  func.func @transform_2(%arg0: i32, %arg1: i32) -> (i32, i32, i32) {
    %c0_i32 = arith.constant 0 : i32
    %c0_i32_0 = arith.constant 0 : i32
    return %arg0, %c0_i32, %arg1 : i32, i32, i32
  }
  func.func @transform_3(%arg0: i32, %arg1: i32) -> (i32, i32) {
    %c0_i32 = arith.constant 0 : i32
    %c0_i32_0 = arith.constant 0 : i32
    %c0_i32_1 = arith.constant 0 : i32
    return %c0_i32, %c0_i32_0 : i32, i32
  }
  func.func @transform_4(%arg0: i32, %arg1: i32) -> (i32, i32) {
    %c0_i32 = arith.constant 0 : i32
    %c0_i32_0 = arith.constant 0 : i32
    %c0_i32_1 = arith.constant 0 : i32
    return %c0_i32, %c0_i32_0 : i32, i32
  }
  func.func @transform_5(%arg0: i32, %arg1: i32) -> (i32, i32) {
    %c0_i32 = arith.constant 0 : i32
    %c0_i32_0 = arith.constant 0 : i32
    %c0_i32_1 = arith.constant 0 : i32
    return %c0_i32, %c0_i32_0 : i32, i32
  }
  func.func @transform_6(%arg0: i32, %arg1: i32) -> (i32, i32) {
    %c0_i32 = arith.constant 0 : i32
    %c0_i32_0 = arith.constant 0 : i32
    %c0_i32_1 = arith.constant 0 : i32
    return %c0_i32, %c0_i32_0 : i32, i32
  }
  func.func @transform_7(%arg0: i32, %arg1: i32) -> (i32, i32) {
    %c0_i32 = arith.constant 0 : i32
    %c0_i32_0 = arith.constant 0 : i32
    %c0_i32_1 = arith.constant 0 : i32
    return %c0_i32, %c0_i32_0 : i32, i32
  }
  func.func @transform_8(%arg0: i32, %arg1: i32) -> (i32, i32) {
    %c0_i32 = arith.constant 0 : i32
    %c0_i32_0 = arith.constant 0 : i32
    %c0_i32_1 = arith.constant 0 : i32
    return %c0_i32, %c0_i32_0 : i32, i32
  }
  func.func @transform_9(%arg0: i32, %arg1: i32) -> (i32, i32, i32) {
    %c0_i32 = arith.constant 0 : i32
    %c0_i32_0 = arith.constant 0 : i32
    return %arg0, %c0_i32, %arg1 : i32, i32, i32
  }
}

</mosaic_0001>

<llo_original>
// kernel: tpu_custom_call.1
$region0: #{tpu_custom_call.1}
  #allocation0 [shape = 'u32[]', space=smem, size = 0x4, offset = 0x4, fixed_abs, tag = 'smem constant byte address 0x4 - core index']
  #allocation1 [shape = 'u32[72,128]{1,0:T(1,128)}', space=vmem, size = 0x9000, scoped, tag = 'internal scratch']
  #allocation2 [shape = 'bf16[8,256]{1,0:T(8,128)(2,1)}', space=vmem, size = 0x1000, scoped, tag = 'scratch operand']
  #allocation3 [shape = 'bf16[32,256]{1,0:T(8,128)(2,1)}', space=vmem, size = 0x4000, scoped, tag = 'scratch operand']
  #allocation4 [shape = 'f32[1,1]{1,0:T(1,128)S(6)}', space=smem, size = 0x200, scoped, tag = 'scoped memory for tpu_custom_call.1']
  %s0 = inlined_call_operand.<no memory space> [shape: f32[1,1], index: 0, kind: input, shape index: {}]
  %s1 = inlined_call_operand.hbm [shape: f32[2,32,256], index: 1, kind: input, shape index: {}]
  %s2 = inlined_call_operand.hbm [shape: f32[2,32,256], index: 2, kind: input, shape index: {}]
  %s3 = inlined_call_operand.vmem [shape: f32[8,32], index: 3, kind: input, shape index: {}]
  %s4 = inlined_call_operand.vmem [shape: f32[8,1], index: 4, kind: input, shape index: {}]
  %s5 = inlined_call_operand.vmem [shape: f32[8,32], index: 5, kind: input, shape index: {}]
  %s6 = inlined_call_operand.vmem [shape: f32[8,1], index: 6, kind: input, shape index: {}]
  %s7 = inlined_call_operand.vmem [shape: f32[32,32], index: 7, kind: input, shape index: {}]
  %s8 = inlined_call_operand.vmem [shape: f32[32,1], index: 8, kind: input, shape index: {}]
  %s9 = inlined_call_operand.hbm [shape: f32[2,32,256], index: 9, kind: output, shape index: {}]
  %s10 = sld [smem:[#allocation0]]
  $region81: #{tpu_custom_call.1} parent=0
    _
  %s12 = ssub.s32 1, %s10
  %s13 = scalar_select 0, %s12, %s10
  %14 = sst [smem:[#allocation4]] %s0
  $region1: #{tpu_custom_call.1} parent=0
    #allocation5 [shape = 'u8[65536]{0}', space=vmem, size = 0x10000, scoped, tag = 'input window, operand 1']
    #allocation6 [shape = 's32[2]{0}', space=sflag, size = 0x8, scoped, tag = 'scoped memory for tpu_custom_call.1']
    #allocation7 [shape = 's32[2]{0}', space=sflag, size = 0x8, scoped, tag = 'scoped memory for tpu_custom_call.1']
    #allocation8 [shape = 'u8[32768]{0}', space=vmem, size = 0x8000, scoped, tag = 'input window, operand 2']
    #allocation9 [shape = 's32[2]{0}', space=sflag, size = 0x8, scoped, tag = 'scoped memory for tpu_custom_call.1']
    #allocation10 [shape = 'u8[32768]{0}', space=vmem, size = 0x8000, scoped, tag = 'output window, operand 0']
    %15 = vsyncpa [#allocation6], 0
    %s16 = scalar_lea.sflag [#allocation6], 1
    %17 = vsyncpa %s16, 0
    %18 = vsyncpa [#allocation9], 0
    %s19 = scalar_lea.sflag [#allocation9], 1
    %20 = vsyncpa %s19, 0
    %21 = vsyncpa [#allocation7], 0
    %s22 = scalar_lea.sflag [#allocation7], 1
    %23 = vsyncpa %s22, 0
    loop: start=0, step=1, limit=6
    $region2: #{tpu_custom_call.1} parent=1 // loop_pre_header
      _
    $region3: #{tpu_custom_call.1} parent=1 // loop_header
      %s25 = sphi 0, %s29
      %p26 = scmp.ge.s32.totalorder %s25, 6
      %s32 = sphi 0, %s44
      %s33 = sphi 0, %s40
      %s34 = sphi 0, %s32
      %s35 = sphi 0, %s33
      %s36 = sphi 0, %s34
      %s37 = sphi 0, %s35
      %s45 = sphi 0, %s45
      %s47 = sphi 0, %s45
      %s48 = sphi 0, %s47
      %s62 = sphi 0, %s48
      %s68 = sphi 0, %s70
      %s71 = sphi 0, %s68
      %s72 = sphi 0, %s71
      %s88 = sphi 0, %s72
      %s96 = sphi 0, %s98
      %s99 = sphi 0, %s96
      %s100 = sphi 0, %s99
      %s116 = sphi 0, %s100
      %s120 = sphi 0, %s120
      %s122 = sphi 0, %s120
      %s123 = sphi 0, %s122
      %s137 = sphi 0, %s123
      %s141 = sphi 0, %s141
      %s143 = sphi 0, %s141
      %s144 = sphi 0, %s143
      %s158 = sphi 0, %s144
      %s162 = sphi 0, %s162
      %s164 = sphi 0, %s162
      %s165 = sphi 0, %s164
      %s179 = sphi 0, %s165
      %s183 = sphi 0, %s183
      %s185 = sphi 0, %s183
      %s186 = sphi 0, %s185
      %s200 = sphi 0, %s186
      %s204 = sphi 0, %s204
      %s206 = sphi 0, %s204
      %s207 = sphi 0, %s206
      %s221 = sphi 0, %s207
      %s225 = sphi 0, %s225
      %s227 = sphi 0, %s225
      %s228 = sphi 0, %s227
      %s242 = sphi 0, %s228
      %s250 = sphi 0, %s252
      %s253 = sphi 0, %s250
      %s254 = sphi 0, %s253
      %s270 = sphi 0, %s254
    $region4: #{tpu_custom_call.1} parent=1 // loop_header_branch
      %28 = sbr.rel (%p26) target = $region8
    $region5: #{tpu_custom_call.1} parent=1 // loop_body
      %s30 = ssub.s32 %s25, 1
      %s31 = ssub.s32 %s25, 2
      %s38 = sadd.s32 1, %s33
      %p39 = scmp.ge.s32.totalorder %s38, 2
      %s40 = scalar_select %p39, 0, %s38
      %s41 = sadd.s32 1, %s32
      %s42 = scalar_select %p39, %s41, %s32
      %p43 = scmp.ge.s32.totalorder %s42, 2
      %s44 = scalar_select %p43, 0, %s42
      %s46 = sadd.s32 %s45, 1
      %p49 = scmp.eq.s32.totalorder %s25, 3
      %p50 = scmp.ne.s32.totalorder %s45, %s47
      %p51 = scmp.eq.s32.totalorder %s25, 0
      %p52 = por %p50, %p51
      %p53 = scmp.ne.s32.totalorder %s45, %s47
      %p54 = scmp.eq.s32.totalorder %s30, 3
      %p55 = por %p53, %p54
      %p56 = scmp.ne.s32.totalorder %s47, %s48
      %p57 = scmp.eq.s32.totalorder %s30, 0
      %p58 = por %p56, %p57
      %p59 = scmp.ne.s32.totalorder %s47, %s48
      %p60 = scmp.eq.s32.totalorder %s31, 3
      %p61 = por %p59, %p60
      %p63 = scmp.ne.s32.totalorder %s48, %s62
      %p64 = scmp.eq.s32.totalorder %s31, 0
      %p65 = por %p63, %p64
      %s66 = ssub.s32 %s32, %s44
      %p67 = scmp.eq.s32.totalorder %s66, 0
      %s69 = sadd.s32 %s68, 1
      %s70 = scalar_select %p67, %s68, %s69
      %p73 = pneg %p67
      %p74 = scmp.eq.s32.totalorder %s25, 3
      %p75 = por %p73, %p74
      %p76 = scmp.ne.s32.totalorder %s68, %s71
      %p77 = scmp.eq.s32.totalorder %s25, 0
      %p78 = por %p76, %p77
      %p79 = scmp.ne.s32.totalorder %s68, %s71
      %p80 = scmp.eq.s32.totalorder %s30, 3
      %p81 = por %p79, %p80
      %p82 = scmp.ne.s32.totalorder %s71, %s72
      %p83 = scmp.eq.s32.totalorder %s30, 0
      %p84 = por %p82, %p83
      %p85 = scmp.ne.s32.totalorder %s71, %s72
      %p86 = scmp.eq.s32.totalorder %s31, 3
      %p87 = por %p85, %p86
      %p89 = scmp.ne.s32.totalorder %s72, %s88
      %p90 = scmp.eq.s32.totalorder %s31, 0
      %p91 = por %p89, %p90
      %s92 = ssub.s32 %s32, %s44
      %s93 = ssub.s32 %s33, %s40
      %s94 = sor.u32 %s92, %s93
      %p95 = scmp.eq.s32.totalorder %s94, 0
      %s97 = sadd.s32 %s96, 1
      %s98 = scalar_select %p95, %s96, %s97
      %p101 = pneg %p95
      %p102 = scmp.eq.s32.totalorder %s25, 3
      %p103 = por %p101, %p102
      %p104 = scmp.ne.s32.totalorder %s96, %s99
      %p105 = scmp.eq.s32.totalorder %s25, 0
      %p106 = por %p104, %p105
      %p107 = scmp.ne.s32.totalorder %s96, %s99
      %p108 = scmp.eq.s32.totalorder %s30, 3
      %p109 = por %p107, %p108
      %p110 = scmp.ne.s32.totalorder %s99, %s100
      %p111 = scmp.eq.s32.totalorder %s30, 0
      %p112 = por %p110, %p111
      %p113 = scmp.ne.s32.totalorder %s99, %s100
      %p114 = scmp.eq.s32.totalorder %s31, 3
      %p115 = por %p113, %p114
      %p117 = scmp.ne.s32.totalorder %s100, %s116
      %p118 = scmp.eq.s32.totalorder %s31, 0
      %p119 = por %p117, %p118
      %s121 = sadd.s32 %s120, 1
      %p124 = scmp.eq.s32.totalorder %s25, 3
      %p125 = scmp.ne.s32.totalorder %s120, %s122
      %p126 = scmp.eq.s32.totalorder %s25, 0
      %p127 = por %p125, %p126
      %p128 = scmp.ne.s32.totalorder %s120, %s122
      %p129 = scmp.eq.s32.totalorder %s30, 3
      %p130 = por %p128, %p129
      %p131 = scmp.ne.s32.totalorder %s122, %s123
      %p132 = scmp.eq.s32.totalorder %s30, 0
      %p133 = por %p131, %p132
      %p134 = scmp.ne.s32.totalorder %s122, %s123
      %p135 = scmp.eq.s32.totalorder %s31, 3
      %p136 = por %p134, %p135
      %p138 = scmp.ne.s32.totalorder %s123, %s137
      %p139 = scmp.eq.s32.totalorder %s31, 0
      %p140 = por %p138, %p139
      %s142 = sadd.s32 %s141, 1
      %p145 = scmp.eq.s32.totalorder %s25, 3
      %p146 = scmp.ne.s32.totalorder %s141, %s143
      %p147 = scmp.eq.s32.totalorder %s25, 0
      %p148 = por %p146, %p147
      %p149 = scmp.ne.s32.totalorder %s141, %s143
      %p150 = scmp.eq.s32.totalorder %s30, 3
      %p151 = por %p149, %p150
      %p152 = scmp.ne.s32.totalorder %s143, %s144
      %p153 = scmp.eq.s32.totalorder %s30, 0
      %p154 = por %p152, %p153
      %p155 = scmp.ne.s32.totalorder %s143, %s144
      %p156 = scmp.eq.s32.totalorder %s31, 3
      %p157 = por %p155, %p156
      %p159 = scmp.ne.s32.totalorder %s144, %s158
      %p160 = scmp.eq.s32.totalorder %s31, 0
      %p161 = por %p159, %p160
      %s163 = sadd.s32 %s162, 1
      %p166 = scmp.eq.s32.totalorder %s25, 3
      %p167 = scmp.ne.s32.totalorder %s162, %s164
      %p168 = scmp.eq.s32.totalorder %s25, 0
      %p169 = por %p167, %p168
      %p170 = scmp.ne.s32.totalorder %s162, %s164
      %p171 = scmp.eq.s32.totalorder %s30, 3
      %p172 = por %p170, %p171
      %p173 = scmp.ne.s32.totalorder %s164, %s165
      %p174 = scmp.eq.s32.totalorder %s30, 0
      %p175 = por %p173, %p174
      %p176 = scmp.ne.s32.totalorder %s164, %s165
      %p177 = scmp.eq.s32.totalorder %s31, 3
      %p178 = por %p176, %p177
      %p180 = scmp.ne.s32.totalorder %s165, %s179
      %p181 = scmp.eq.s32.totalorder %s31, 0
      %p182 = por %p180, %p181
      %s184 = sadd.s32 %s183, 1
      %p187 = scmp.eq.s32.totalorder %s25, 3
      %p188 = scmp.ne.s32.totalorder %s183, %s185
      %p189 = scmp.eq.s32.totalorder %s25, 0
      %p190 = por %p188, %p189
      %p191 = scmp.ne.s32.totalorder %s183, %s185
      %p192 = scmp.eq.s32.totalorder %s30, 3
      %p193 = por %p191, %p192
      %p194 = scmp.ne.s32.totalorder %s185, %s186
      %p195 = scmp.eq.s32.totalorder %s30, 0
      %p196 = por %p194, %p195
      %p197 = scmp.ne.s32.totalorder %s185, %s186
      %p198 = scmp.eq.s32.totalorder %s31, 3
      %p199 = por %p197, %p198
      %p201 = scmp.ne.s32.totalorder %s186, %s200
      %p202 = scmp.eq.s32.totalorder %s31, 0
      %p203 = por %p201, %p202
      %s205 = sadd.s32 %s204, 1
      %p208 = scmp.eq.s32.totalorder %s25, 3
      %p209 = scmp.ne.s32.totalorder %s204, %s206
      %p210 = scmp.eq.s32.totalorder %s25, 0
      %p211 = por %p209, %p210
      %p212 = scmp.ne.s32.totalorder %s204, %s206
      %p213 = scmp.eq.s32.totalorder %s30, 3
      %p214 = por %p212, %p213
      %p215 = scmp.ne.s32.totalorder %s206, %s207
      %p216 = scmp.eq.s32.totalorder %s30, 0
      %p217 = por %p215, %p216
      %p218 = scmp.ne.s32.totalorder %s206, %s207
      %p219 = scmp.eq.s32.totalorder %s31, 3
      %p220 = por %p218, %p219
      %p222 = scmp.ne.s32.totalorder %s207, %s221
      %p223 = scmp.eq.s32.totalorder %s31, 0
      %p224 = por %p222, %p223
      %s226 = sadd.s32 %s225, 1
      %p229 = scmp.eq.s32.totalorder %s25, 3
      %p230 = scmp.ne.s32.totalorder %s225, %s227
      %p231 = scmp.eq.s32.totalorder %s25, 0
      %p232 = por %p230, %p231
      %p233 = scmp.ne.s32.totalorder %s225, %s227
      %p234 = scmp.eq.s32.totalorder %s30, 3
      %p235 = por %p233, %p234
      %p236 = scmp.ne.s32.totalorder %s227, %s228
      %p237 = scmp.eq.s32.totalorder %s30, 0
      %p238 = por %p236, %p237
      %p239 = scmp.ne.s32.totalorder %s227, %s228
      %p240 = scmp.eq.s32.totalorder %s31, 3
      %p241 = por %p239, %p240
      %p243 = scmp.ne.s32.totalorder %s228, %s242
      %p244 = scmp.eq.s32.totalorder %s31, 0
      %p245 = por %p243, %p244
      %s246 = ssub.s32 %s32, %s44
      %s247 = ssub.s32 %s33, %s40
      %s248 = sor.u32 %s246, %s247
      %p249 = scmp.eq.s32.totalorder %s248, 0
      %s251 = sadd.s32 %s250, 1
      %s252 = scalar_select %p249, %s250, %s251
      %p255 = pneg %p249
      %p256 = scmp.eq.s32.totalorder %s25, 3
      %p257 = por %p255, %p256
      %p258 = scmp.ne.s32.totalorder %s250, %s253
      %p259 = scmp.eq.s32.totalorder %s25, 0
      %p260 = por %p258, %p259
      %p261 = scmp.ne.s32.totalorder %s250, %s253
      %p262 = scmp.eq.s32.totalorder %s30, 3
      %p263 = por %p261, %p262
      %p264 = scmp.ne.s32.totalorder %s253, %s254
      %p265 = scmp.eq.s32.totalorder %s30, 0
      %p266 = por %p264, %p265
      %p267 = scmp.ne.s32.totalorder %s253, %s254
      %p268 = scmp.eq.s32.totalorder %s31, 3
      %p269 = por %p267, %p268
      %p271 = scmp.ne.s32.totalorder %s254, %s270
      %p272 = scmp.eq.s32.totalorder %s31, 0
      %p273 = por %p271, %p272
      %p274 = scmp.le.s32.totalorder 1, %s25
      %p275 = scmp.lt.s32.totalorder %s25, 5
      %p276 = pnand %p274, %p275
      %p277 = pneg %p276
      // Predicated region
      $region9: #{tpu_custom_call.1} parent=5 // pred_check
        _
      $region10: #{tpu_custom_call.1} parent=5 // pred_check_branch
        %279 = sbr.rel (%p276) target = $region12
      $region11: #{tpu_custom_call.1} parent=5 // pred_region
        %s280 = ssub.s32 %s25, 1
        // Predicated region
        $region13: #{tpu_custom_call.1} parent=11 // pred_check
          %p281 = pneg %p58
        $region14: #{tpu_custom_call.1} parent=11 // pred_check_branch
          %283 = sbr.rel (%p281) target = $region16
        $region15: #{tpu_custom_call.1} parent=11 // pred_region
          _
        $region16: #{tpu_custom_call.1} parent=11 // pred_fallthru
          _
        // Predicated region
        $region17: #{tpu_custom_call.1} parent=11 // pred_check
          %p284 = pneg %p133
        $region18: #{tpu_custom_call.1} parent=11 // pred_check_branch
          %286 = sbr.rel (%p284) target = $region20
        $region19: #{tpu_custom_call.1} parent=11 // pred_region
          _
        $region20: #{tpu_custom_call.1} parent=11 // pred_fallthru
          _
        // Predicated region
        $region21: #{tpu_custom_call.1} parent=11 // pred_check
          %p287 = pneg %p154
        $region22: #{tpu_custom_call.1} parent=11 // pred_check_branch
          %289 = sbr.rel (%p287) target = $region24
        $region23: #{tpu_custom_call.1} parent=11 // pred_region
          _
        $region24: #{tpu_custom_call.1} parent=11 // pred_fallthru
          _
        // Predicated region
        $region25: #{tpu_custom_call.1} parent=11 // pred_check
          %p290 = pneg %p175
        $region26: #{tpu_custom_call.1} parent=11 // pred_check_branch
          %292 = sbr.rel (%p290) target = $region28
        $region27: #{tpu_custom_call.1} parent=11 // pred_region
          _
        $region28: #{tpu_custom_call.1} parent=11 // pred_fallthru
          _
        // Predicated region
        $region29: #{tpu_custom_call.1} parent=11 // pred_check
          %p293 = pneg %p196
        $region30: #{tpu_custom_call.1} parent=11 // pred_check_branch
          %295 = sbr.rel (%p293) target = $region32
        $region31: #{tpu_custom_call.1} parent=11 // pred_region
          _
        $region32: #{tpu_custom_call.1} parent=11 // pred_fallthru
          _
        // Predicated region
        $region33: #{tpu_custom_call.1} parent=11 // pred_check
          %p296 = pneg %p217
        $region34: #{tpu_custom_call.1} parent=11 // pred_check_branch
          %298 = sbr.rel (%p296) target = $region36
        $region35: #{tpu_custom_call.1} parent=11 // pred_region
          _
        $region36: #{tpu_custom_call.1} parent=11 // pred_fallthru
          _
        // Predicated region
        $region37: #{tpu_custom_call.1} parent=11 // pred_check
          %p299 = pneg %p238
        $region38: #{tpu_custom_call.1} parent=11 // pred_check_branch
          %301 = sbr.rel (%p299) target = $region40
        $region39: #{tpu_custom_call.1} parent=11 // pred_region
          _
        $region40: #{tpu_custom_call.1} parent=11 // pred_fallthru
          _
      $region12: #{tpu_custom_call.1} parent=5 // pred_fallthru
        _
      %p302 = scmp.lt.s32.totalorder %s25, 4
      // Predicated region
      $region41: #{tpu_custom_call.1} parent=5 // pred_check
        %p303 = pneg %p302
      $region42: #{tpu_custom_call.1} parent=5 // pred_check_branch
        %305 = sbr.rel (%p303) target = $region44
      $region43: #{tpu_custom_call.1} parent=5 // pred_region
        // Predicated region
        $region45: #{tpu_custom_call.1} parent=43 // pred_check
          %p306 = pneg %p78
        $region46: #{tpu_custom_call.1} parent=43 // pred_check_branch
          %308 = sbr.rel (%p306) target = $region48
        $region47: #{tpu_custom_call.1} parent=43 // pred_region
          %s309 = sand.u32 %s68, 1
          %s310 = scalar_lea.sflag [#allocation6], %s309
          %s311 = sand.u32 %s68, 1
          %s312 = smul.addr %s311, 64
          %s313 = scalar_lea.vmem [#allocation5], %s312
          %315 = vsyncadd %s310, 0
          %s316 = smul.addr %s32, 8
          %s317 = smul.addr %s316, 8
          %s318 = scalar_lea.hbm %s1, %s317
          %s319 = sshll.u32 %s318, 4
          %s320 = int_to_ptr.hbm [resolvable:$true] %s319
          %s321 = sshll.u32 %s313, 4
          %s322 = int_to_ptr.vmem [resolvable:$true] %s321
          %327 = dma.hbm_to_vmem [thread:$0]  %s320, 1024, %s322, %s310, 256, 256, 16
        $region48: #{tpu_custom_call.1} parent=43 // pred_fallthru
          _
        // Predicated region
        $region49: #{tpu_custom_call.1} parent=43 // pred_check
          %p328 = pneg %p106
        $region50: #{tpu_custom_call.1} parent=43 // pred_check_branch
          %330 = sbr.rel (%p328) target = $region52
        $region51: #{tpu_custom_call.1} parent=43 // pred_region
          %s331 = sand.u32 %s96, 1
          %s332 = scalar_lea.sflag [#allocation9], %s331
          %s333 = sand.u32 %s96, 1
          %s334 = smul.addr %s333, 32
          %s335 = scalar_lea.vmem [#allocation8], %s334
          %337 = vsyncadd %s332, 0
          %s338 = smul.addr %s32, 8
          %s339 = sadd.s32 %s33, %s338
          %s340 = smul.addr %s339, 8
          %s341 = scalar_lea.hbm %s2, %s340
          %s342 = sshll.u32 %s341, 4
          %s343 = int_to_ptr.hbm [resolvable:$true] %s342
          %s344 = sshll.u32 %s335, 4
          %s345 = int_to_ptr.vmem [resolvable:$true] %s344
          %350 = dma.hbm_to_vmem [thread:$0]  %s343, 512, %s345, %s332, 256, 128, 8
        $region52: #{tpu_custom_call.1} parent=43 // pred_fallthru
          _
      $region44: #{tpu_custom_call.1} parent=5 // pred_fallthru
        _
      %p351 = scmp.le.s32.totalorder 1, %s25
      %p352 = scmp.lt.s32.totalorder %s25, 5
      %p353 = pnand %p351, %p352
      %p354 = pneg %p353
      // Predicated region
      $region53: #{tpu_custom_call.1} parent=5 // pred_check
        _
      $region54: #{tpu_custom_call.1} parent=5 // pred_check_branch
        %356 = sbr.rel (%p353) target = $region56
      $region55: #{tpu_custom_call.1} parent=5 // pred_region
        %s357 = ssub.s32 %s25, 1
        %s358 = sand.u32 %s71, 1
        %s359 = scalar_lea.sflag [#allocation6], %s358
        %s360 = sand.u32 %s71, 1
        %s361 = smul.addr %s360, 64
        %s362 = scalar_lea.vmem [#allocation5], %s361
        // Predicated region
        $region57: #{tpu_custom_call.1} parent=55 // pred_check
          %p363 = pneg %p84
        $region58: #{tpu_custom_call.1} parent=55 // pred_check_branch
          %365 = sbr.rel (%p363) target = $region60
        $region59: #{tpu_custom_call.1} parent=55 // pred_region
          %367 = dma.done %s359, 1024
        $region60: #{tpu_custom_call.1} parent=55 // pred_fallthru
          _
        %s368 = sand.u32 %s99, 1
        %s369 = scalar_lea.sflag [#allocation9], %s368
        %s370 = sand.u32 %s99, 1
        %s371 = smul.addr %s370, 32
        %s372 = scalar_lea.vmem [#allocation8], %s371
        // Predicated region
        $region61: #{tpu_custom_call.1} parent=55 // pred_check
          %p373 = pneg %p112
        $region62: #{tpu_custom_call.1} parent=55 // pred_check_branch
          %375 = sbr.rel (%p373) target = $region64
        $region63: #{tpu_custom_call.1} parent=55 // pred_region
          %377 = dma.done %s369, 512
        $region64: #{tpu_custom_call.1} parent=55 // pred_fallthru
          _
        %p378 = pneg %p58
        %p379 = pneg %p55
        %s380 = sand.u32 %s71, 1
        %s381 = scalar_lea.sflag [#allocation6], %s380
        %s382 = sand.u32 %s71, 1
        %s383 = smul.addr %s382, 64
        %s384 = scalar_lea.vmem [#allocation5], %s383
        %p385 = pneg %p84
        %p386 = pneg %p81
        %s387 = sand.u32 %s99, 1
        %s388 = scalar_lea.sflag [#allocation9], %s387
        %s389 = sand.u32 %s99, 1
        %s390 = smul.addr %s389, 32
        %s391 = scalar_lea.vmem [#allocation8], %s390
        %p392 = pneg %p112
        %p393 = pneg %p109
        %p394 = pneg %p133
        %p395 = pneg %p130
        %p396 = pneg %p154
        %p397 = pneg %p151
        %p398 = pneg %p175
        %p399 = pneg %p172
        %p400 = pneg %p196
        %p401 = pneg %p193
        %p402 = pneg %p217
        %p403 = pneg %p214
        %p404 = pneg %p238
        %p405 = pneg %p235
        %p406 = pneg %p266
        %p407 = pneg %p263
        %s408 = sand.u32 %s253, 1
        %s409 = scalar_lea.sflag [#allocation7], %s408
        %s410 = sand.u32 %s253, 1
        %s411 = smul.addr %s410, 32
        %s412 = scalar_lea.vmem [#allocation10], %s411
        %p414 = scmp.eq.s32.totalorder %s35, 0
        // Predicated region
        $region65: #{tpu_custom_call.1} parent=55 // pred_check
          %p415 = pneg %p414
        $region66: #{tpu_custom_call.1} parent=55 // pred_check_branch
          %417 = sbr.rel (%p415) target = $region68
        $region67: #{tpu_custom_call.1} parent=55 // pred_region
          %v418 = vld [vmem:[%s362] sm:$0xff]
          %v419 = vld [vmem:[%s362 + $0x8] sm:$0xff]
          %v420 = vld [vmem:[%s362 + $0x10] sm:$0xff]
          %v421 = vld [vmem:[%s362 + $0x18] sm:$0xff]
          %v422 = vld [vmem:[%s362 + $0x20] sm:$0xff]
          %v423 = vld [vmem:[%s362 + $0x28] sm:$0xff]
          %v424 = vld [vmem:[%s362 + $0x30] sm:$0xff]
          %v425 = vld [vmem:[%s362 + $0x38] sm:$0xff]
          %v426 = vld [vmem:[%s5] sm:$0xff]
          %v427 = vld [vmem:[%s6] sm:$0xff]
          %429 = vset.pattern.permute.xlu0 0
          %430 = vperm.xlu0 %429, %v427
          %v431 = vpop.permute.xlu0 %430
          %vm433 = vcmask 261120
          %v435 = vsel %vm433, %v426, 0
          %437 = vmatpush.msra.mxu0 0.0
          %438 = vmatpush.msra.mxu0 0.0
          %439 = vmatpush.msra.mxu0 0.0
          %440 = vmatpush.msra.mxu0 0.0
          %441 = vmatpush.msra.mxu0 0.0
          %442 = vmatpush.msra.mxu0 0.0
          %443 = vmatpush.msra.mxu0 0.0
          %444 = vmatpush.msra.mxu0 0.0
          %445 = vmatpush.msra.mxu0 0.0
          %446 = vmatpush.msra.mxu0 0.0
          %447 = vmatpush.msra.mxu0 0.0
          %448 = vmatpush.msra.mxu0 0.0
          %449 = vmatpush.msra.mxu0 %v424
          %450 = vmatpush.msra.mxu0 %v422
          %451 = vmatpush.msra.mxu0 %v420
          %452 = vmatpush.msra.mxu0 %v418
          %453 = vmatmul.f32.gmra.mxu0 %v435
          %v454 = vpop.f32.mrf.mxu0
          %v455 = vadd.f32 %v431, %v454
          %456 = vdwg.mxu0
          %457 = vmatpush.msra.mxu0 0.0
          %458 = vmatpush.msra.mxu0 0.0
          %459 = vmatpush.msra.mxu0 0.0
          %460 = vmatpush.msra.mxu0 0.0
          %461 = vmatpush.msra.mxu0 0.0
          %462 = vmatpush.msra.mxu0 0.0
          %463 = vmatpush.msra.mxu0 0.0
          %464 = vmatpush.msra.mxu0 0.0
          %465 = vmatpush.msra.mxu0 0.0
          %466 = vmatpush.msra.mxu0 0.0
          %467 = vmatpush.msra.mxu0 0.0
          %468 = vmatpush.msra.mxu0 0.0
          %469 = vmatpush.msra.mxu0 %v425
          %470 = vmatpush.msra.mxu0 %v423
          %471 = vmatpush.msra.mxu0 %v421
          %472 = vmatpush.msra.mxu0 %v419
          %473 = vmatmul.f32.gmra.mxu0 %v435
          %v474 = vpop.f32.mrf.mxu0
          %v475 = vadd.f32 %v431, %v474
          %476 = vdwg.mxu0
          %v477 = vld [vmem:[%s7] sm:$0xff]
          %v478 = vld [vmem:[%s7 + $0x8] sm:$0xff]
          %v479 = vld [vmem:[%s7 + $0x10] sm:$0xff]
          %v480 = vld [vmem:[%s7 + $0x18] sm:$0xff]
          %v481 = vld [vmem:[%s8] sm:$0xff]
          %v482 = vld [vmem:[%s8 + $0x8] sm:$0xff]
          %v483 = vld [vmem:[%s8 + $0x10] sm:$0xff]
          %v484 = vld [vmem:[%s8 + $0x18] sm:$0xff]
          %486 = vset.pattern.permute.xlu0 0
          %487 = vperm.xlu0 %486, %v481
          %v488 = vpop.permute.xlu0 %487
          %491 = vset.pattern.permute.xlu0 0
          %492 = vperm.xlu0 %491, %v482
          %v493 = vpop.permute.xlu0 %492
          %496 = vset.pattern.permute.xlu0 0
          %497 = vperm.xlu0 %496, %v483
          %v498 = vpop.permute.xlu0 %497
          %501 = vset.pattern.permute.xlu0 0
          %502 = vperm.xlu0 %501, %v484
          %v503 = vpop.permute.xlu0 %502
          %v506 = vsel %vm433, %v477, 0
          %v509 = vsel %vm433, %v478, 0
          %v512 = vsel %vm433, %v479, 0
          %v515 = vsel %vm433, %v480, 0
          %517 = vmatpush.msra.mxu0 0.0
          %518 = vmatpush.msra.mxu0 0.0
          %519 = vmatpush.msra.mxu0 0.0
          %520 = vmatpush.msra.mxu0 0.0
          %521 = vmatpush.msra.mxu0 0.0
          %522 = vmatpush.msra.mxu0 0.0
          %523 = vmatpush.msra.mxu0 0.0
          %524 = vmatpush.msra.mxu0 0.0
          %525 = vmatpush.msra.mxu0 0.0
          %526 = vmatpush.msra.mxu0 0.0
          %527 = vmatpush.msra.mxu0 0.0
          %528 = vmatpush.msra.mxu0 0.0
          %529 = vmatpush.msra.mxu0 %v424
          %530 = vmatpush.msra.mxu0 %v422
          %531 = vmatpush.msra.mxu0 %v420
          %532 = vmatpush.msra.mxu0 %v418
          %533 = vmatmul.f32.gmra.mxu0 %v506
          %v534 = vpop.f32.mrf.mxu0
          %v535 = vadd.f32 %v488, %v534
          %536 = vmatmul.f32.gmra.mxu0 %v509
          %v537 = vpop.f32.mrf.mxu0
          %v538 = vadd.f32 %v493, %v537
          %539 = vmatmul.f32.gmra.mxu0 %v512
          %v540 = vpop.f32.mrf.mxu0
          %v541 = vadd.f32 %v498, %v540
          %542 = vmatmul.f32.gmra.mxu0 %v515
          %v543 = vpop.f32.mrf.mxu0
          %v544 = vadd.f32 %v503, %v543
          %545 = vdwg.mxu0
          %546 = vmatpush.msra.mxu0 0.0
          %547 = vmatpush.msra.mxu0 0.0
          %548 = vmatpush.msra.mxu0 0.0
          %549 = vmatpush.msra.mxu0 0.0
          %550 = vmatpush.msra.mxu0 0.0
          %551 = vmatpush.msra.mxu0 0.0
          %552 = vmatpush.msra.mxu0 0.0
          %553 = vmatpush.msra.mxu0 0.0
          %554 = vmatpush.msra.mxu0 0.0
          %555 = vmatpush.msra.mxu0 0.0
          %556 = vmatpush.msra.mxu0 0.0
          %557 = vmatpush.msra.mxu0 0.0
          %558 = vmatpush.msra.mxu0 %v425
          %559 = vmatpush.msra.mxu0 %v423
          %560 = vmatpush.msra.mxu0 %v421
          %561 = vmatpush.msra.mxu0 %v419
          %562 = vmatmul.f32.gmra.mxu0 %v506
          %v563 = vpop.f32.mrf.mxu0
          %v564 = vadd.f32 %v488, %v563
          %565 = vmatmul.f32.gmra.mxu0 %v509
          %v566 = vpop.f32.mrf.mxu0
          %v567 = vadd.f32 %v493, %v566
          %568 = vmatmul.f32.gmra.mxu0 %v512
          %v569 = vpop.f32.mrf.mxu0
          %v570 = vadd.f32 %v498, %v569
          %571 = vmatmul.f32.gmra.mxu0 %v515
          %v572 = vpop.f32.mrf.mxu0
          %v573 = vadd.f32 %v503, %v572
          %574 = vdwg.mxu0
          %v575 = vpack.c.bf16 %v475, %v455
          %576 = vst [vmem:[#allocation2] sm:$0xff] %v575
          %v577 = vpack.c.bf16 %v564, %v535
          %v578 = vpack.c.bf16 %v567, %v538
          %v579 = vpack.c.bf16 %v570, %v541
          %v580 = vpack.c.bf16 %v573, %v544
          %581 = vst [vmem:[#allocation3] sm:$0xff] %v577
          %582 = vst [vmem:[#allocation3 + $0x8] sm:$0xff] %v578
          %583 = vst [vmem:[#allocation3 + $0x10] sm:$0xff] %v579
          %584 = vst [vmem:[#allocation3 + $0x18] sm:$0xff] %v580
        $region68: #{tpu_custom_call.1} parent=55 // pred_fallthru
          _
        %v585 = vld [vmem:[%s372] sm:$0xff]
        %v586 = vld [vmem:[%s372 + $0x8] sm:$0xff]
        %v587 = vld [vmem:[%s372 + $0x10] sm:$0xff]
        %v588 = vld [vmem:[%s372 + $0x18] sm:$0xff]
        %v589 = vld [vmem:[%s3] sm:$0xff]
        %v590 = vld [vmem:[%s4] sm:$0xff]
        %592 = vset.pattern.permute.xlu0 0
        %593 = vperm.xlu0 %592, %v590
        %v594 = vpop.permute.xlu0 %593
        %vm596 = vcmask 261120
        %v598 = vsel %vm596, %v589, 0
        %600 = vmatpush.msra.mxu0 0.0
        %601 = vmatpush.msra.mxu0 0.0
        %602 = vmatpush.msra.mxu0 0.0
        %603 = vmatpush.msra.mxu0 0.0
        %604 = vmatpush.msra.mxu0 0.0
        %605 = vmatpush.msra.mxu0 0.0
        %606 = vmatpush.msra.mxu0 0.0
        %607 = vmatpush.msra.mxu0 0.0
        %608 = vmatpush.msra.mxu0 0.0
        %609 = vmatpush.msra.mxu0 0.0
        %610 = vmatpush.msra.mxu0 0.0
        %611 = vmatpush.msra.mxu0 0.0
        %612 = vmatpush.msra.mxu0 %v588
        %613 = vmatpush.msra.mxu0 %v587
        %614 = vmatpush.msra.mxu0 %v586
        %615 = vmatpush.msra.mxu0 %v585
        %616 = vmatmul.f32.gmra.mxu0 %v598
        %v617 = vpop.f32.mrf.mxu0
        %v618 = vadd.f32 %v594, %v617
        %619 = vdwg.mxu0
        %620 = vxpose.xlu0.b32.start [1/16] %v618, 128
        %621 = vxpose.xlu0.b32.cont [2/16] 0.0, 128
        %622 = vxpose.xlu0.b32.cont [3/16] 0.0, 128
        %623 = vxpose.xlu0.b32.cont [4/16] 0.0, 128
        %624 = vxpose.xlu0.b32.cont [5/16] 0.0, 128
        %625 = vxpose.xlu0.b32.cont [6/16] 0.0, 128
        %626 = vxpose.xlu0.b32.cont [7/16] 0.0, 128
        %627 = vxpose.xlu0.b32.cont [8/16] 0.0, 128
        %628 = vxpose.xlu0.b32.cont [9/16] 0.0, 128
        %629 = vxpose.xlu0.b32.cont [10/16] 0.0, 128
        %630 = vxpose.xlu0.b32.cont [11/16] 0.0, 128
        %631 = vxpose.xlu0.b32.cont [12/16] 0.0, 128
        %632 = vxpose.xlu0.b32.cont [13/16] 0.0, 128
        %633 = vxpose.xlu0.b32.cont [14/16] 0.0, 128
        %634 = vxpose.xlu0.b32.cont [15/16] 0.0, 128
        %635 = vxpose.xlu0.b32.end [16/16] 0.0, 128
        %v636 = vpop.trf.xlu0
        %v637 = vpop.trf.xlu0
        %v638 = vpop.trf.xlu0
        %v639 = vpop.trf.xlu0
        %v640 = vpop.trf.xlu0
        %v641 = vpop.trf.xlu0
        %v642 = vpop.trf.xlu0
        %v643 = vpop.trf.xlu0
        %v644 = vpop.trf.xlu0
        %v645 = vpop.trf.xlu0
        %v646 = vpop.trf.xlu0
        %v647 = vpop.trf.xlu0
        %v648 = vpop.trf.xlu0
        %v649 = vpop.trf.xlu0
        %v650 = vpop.trf.xlu0
        %v651 = vpop.trf.xlu0
        %v652 = vpack.c.bf16 %v637, %v636
        %v653 = vpack.c.bf16 %v639, %v638
        %v654 = vpack.c.bf16 %v641, %v640
        %v655 = vpack.c.bf16 %v643, %v642
        %v656 = vpack.c.bf16 %v645, %v644
        %v657 = vpack.c.bf16 %v647, %v646
        %v658 = vpack.c.bf16 %v649, %v648
        %v659 = vpack.c.bf16 %v651, %v650
        %v660 = vld [vmem:[#allocation2] sm:$0xff]
        %v662 = vunpack.c.l.b16 %v660
        %v663 = vunpack.c.h.b16 %v660
        %v664 = vpack.c.b16 %v662, %v662
        %v665 = vpack.c.b16 %v663, %v663
        %vm666 = vcmask 64512
        %v668 = vsel %vm666, %v652, 0
        %v671 = vsel %vm666, %v653, 0
        %v674 = vsel %vm666, %v654, 0
        %v677 = vsel %vm666, %v655, 0
        %v680 = vsel %vm666, %v656, 0
        %v683 = vsel %vm666, %v657, 0
        %v686 = vsel %vm666, %v658, 0
        %v689 = vsel %vm666, %v659, 0
        %vm691 = vcmask 1043456
        %v693 = vsel %vm691, %v664, 0
        %v696 = vsel %vm691, %v665, 0
        %698 = vmatpush.bf16.msra.mxu0 0
        %699 = vmatpush.bf16.msra.mxu0 0
        %700 = vmatpush.bf16.msra.mxu0 0
        %701 = vmatpush.bf16.msra.mxu0 0
        %702 = vmatpush.bf16.msra.mxu0 0
        %703 = vmatpush.bf16.msra.mxu0 0
        %704 = vmatpush.bf16.msra.mxu0 0
        %705 = vmatpush.bf16.msra.mxu0 %v693
        %706 = vmatmul.bf16.gmra.mxu0 %v668
        %v707 = vpop.f32.mrf.mxu0
        %v708 = vadd.f32 0.0, %v707
        %v709 = vpop.f32.mrf.mxu0
        %v710 = vadd.f32 0.0, %v709
        %711 = vmatmul.bf16.gmra.mxu0 %v671
        %v712 = vpop.f32.mrf.mxu0
        %v713 = vadd.f32 0.0, %v712
        %v714 = vpop.f32.mrf.mxu0
        %v715 = vadd.f32 0.0, %v714
        %716 = vmatmul.bf16.gmra.mxu0 %v674
        %v717 = vpop.f32.mrf.mxu0
        %v718 = vadd.f32 0.0, %v717
        %v719 = vpop.f32.mrf.mxu0
        %v720 = vadd.f32 0.0, %v719
        %721 = vmatmul.bf16.gmra.mxu0 %v677
        %v722 = vpop.f32.mrf.mxu0
        %v723 = vadd.f32 0.0, %v722
        %v724 = vpop.f32.mrf.mxu0
        %v725 = vadd.f32 0.0, %v724
        %726 = vmatmul.bf16.gmra.mxu0 %v680
        %v727 = vpop.f32.mrf.mxu0
        %v728 = vadd.f32 0.0, %v727
        %v729 = vpop.f32.mrf.mxu0
        %v730 = vadd.f32 0.0, %v729
        %731 = vmatmul.bf16.gmra.mxu0 %v683
        %v732 = vpop.f32.mrf.mxu0
        %v733 = vadd.f32 0.0, %v732
        %v734 = vpop.f32.mrf.mxu0
        %v735 = vadd.f32 0.0, %v734
        %736 = vmatmul.bf16.gmra.mxu0 %v686
        %v737 = vpop.f32.mrf.mxu0
        %v738 = vadd.f32 0.0, %v737
        %v739 = vpop.f32.mrf.mxu0
        %v740 = vadd.f32 0.0, %v739
        %741 = vmatmul.bf16.gmra.mxu0 %v689
        %v742 = vpop.f32.mrf.mxu0
        %v743 = vadd.f32 0.0, %v742
        %v744 = vpop.f32.mrf.mxu0
        %v745 = vadd.f32 0.0, %v744
        %746 = vdwg.mxu0
        %747 = vmatpush.bf16.msra.mxu0 0
        %748 = vmatpush.bf16.msra.mxu0 0
        %749 = vmatpush.bf16.msra.mxu0 0
        %750 = vmatpush.bf16.msra.mxu0 0
        %751 = vmatpush.bf16.msra.mxu0 0
        %752 = vmatpush.bf16.msra.mxu0 0
        %753 = vmatpush.bf16.msra.mxu0 0
        %754 = vmatpush.bf16.msra.mxu0 %v696
        %755 = vmatmul.bf16.gmra.mxu0 %v668
        %v756 = vpop.f32.mrf.mxu0
        %v757 = vadd.f32 0.0, %v756
        %v758 = vpop.f32.mrf.mxu0
        %v759 = vadd.f32 0.0, %v758
        %760 = vmatmul.bf16.gmra.mxu0 %v671
        %v761 = vpop.f32.mrf.mxu0
        %v762 = vadd.f32 0.0, %v761
        %v763 = vpop.f32.mrf.mxu0
        %v764 = vadd.f32 0.0, %v763
        %765 = vmatmul.bf16.gmra.mxu0 %v674
        %v766 = vpop.f32.mrf.mxu0
        %v767 = vadd.f32 0.0, %v766
        %v768 = vpop.f32.mrf.mxu0
        %v769 = vadd.f32 0.0, %v768
        %770 = vmatmul.bf16.gmra.mxu0 %v677
        %v771 = vpop.f32.mrf.mxu0
        %v772 = vadd.f32 0.0, %v771
        %v773 = vpop.f32.mrf.mxu0
        %v774 = vadd.f32 0.0, %v773
        %775 = vmatmul.bf16.gmra.mxu0 %v680
        %v776 = vpop.f32.mrf.mxu0
        %v777 = vadd.f32 0.0, %v776
        %v778 = vpop.f32.mrf.mxu0
        %v779 = vadd.f32 0.0, %v778
        %780 = vmatmul.bf16.gmra.mxu0 %v683
        %v781 = vpop.f32.mrf.mxu0
        %v782 = vadd.f32 0.0, %v781
        %v783 = vpop.f32.mrf.mxu0
        %v784 = vadd.f32 0.0, %v783
        %785 = vmatmul.bf16.gmra.mxu0 %v686
        %v786 = vpop.f32.mrf.mxu0
        %v787 = vadd.f32 0.0, %v786
        %v788 = vpop.f32.mrf.mxu0
        %v789 = vadd.f32 0.0, %v788
        %790 = vmatmul.bf16.gmra.mxu0 %v689
        %v791 = vpop.f32.mrf.mxu0
        %v792 = vadd.f32 0.0, %v791
        %v793 = vpop.f32.mrf.mxu0
        %v794 = vadd.f32 0.0, %v793
        %795 = vdwg.mxu0
        %v796 = vmax.f32 %v708, %v757
        %797 = vmax.xlane.f32.xlu0 %v796
        %v798 = vpop.xlane.xlu0 %797
        %v799 = vmax.f32 %v710, %v759
        %800 = vmax.xlane.f32.xlu0 %v799
        %v801 = vpop.xlane.xlu0 %800
        %v802 = vmax.f32 %v713, %v762
        %803 = vmax.xlane.f32.xlu0 %v802
        %v804 = vpop.xlane.xlu0 %803
        %v805 = vmax.f32 %v715, %v764
        %806 = vmax.xlane.f32.xlu0 %v805
        %v807 = vpop.xlane.xlu0 %806
        %v808 = vmax.f32 %v718, %v767
        %809 = vmax.xlane.f32.xlu0 %v808
        %v810 = vpop.xlane.xlu0 %809
        %v811 = vmax.f32 %v720, %v769
        %812 = vmax.xlane.f32.xlu0 %v811
        %v813 = vpop.xlane.xlu0 %812
        %v814 = vmax.f32 %v723, %v772
        %815 = vmax.xlane.f32.xlu0 %v814
        %v816 = vpop.xlane.xlu0 %815
        %v817 = vmax.f32 %v725, %v774
        %818 = vmax.xlane.f32.xlu0 %v817
        %v819 = vpop.xlane.xlu0 %818
        %v820 = vmax.f32 %v728, %v777
        %821 = vmax.xlane.f32.xlu0 %v820
        %v822 = vpop.xlane.xlu0 %821
        %v823 = vmax.f32 %v730, %v779
        %824 = vmax.xlane.f32.xlu0 %v823
        %v825 = vpop.xlane.xlu0 %824
        %v826 = vmax.f32 %v733, %v782
        %827 = vmax.xlane.f32.xlu0 %v826
        %v828 = vpop.xlane.xlu0 %827
        %v829 = vmax.f32 %v735, %v784
        %830 = vmax.xlane.f32.xlu0 %v829
        %v831 = vpop.xlane.xlu0 %830
        %v832 = vmax.f32 %v738, %v787
        %833 = vmax.xlane.f32.xlu0 %v832
        %v834 = vpop.xlane.xlu0 %833
        %v835 = vmax.f32 %v740, %v789
        %836 = vmax.xlane.f32.xlu0 %v835
        %v837 = vpop.xlane.xlu0 %836
        %v838 = vmax.f32 %v743, %v792
        %839 = vmax.xlane.f32.xlu0 %v838
        %v840 = vpop.xlane.xlu0 %839
        %v841 = vmax.f32 %v745, %v794
        %842 = vmax.xlane.f32.xlu0 %v841
        %v843 = vpop.xlane.xlu0 %842
        %v844 = vsub.f32 %v708, %v798
        %v845 = vsub.f32 %v757, %v798
        %v846 = vsub.f32 %v710, %v801
        %v847 = vsub.f32 %v759, %v801
        %v848 = vsub.f32 %v713, %v804
        %v849 = vsub.f32 %v762, %v804
        %v850 = vsub.f32 %v715, %v807
        %v851 = vsub.f32 %v764, %v807
        %v852 = vsub.f32 %v718, %v810
        %v853 = vsub.f32 %v767, %v810
        %v854 = vsub.f32 %v720, %v813
        %v855 = vsub.f32 %v769, %v813
        %v856 = vsub.f32 %v723, %v816
        %v857 = vsub.f32 %v772, %v816
        %v858 = vsub.f32 %v725, %v819
        %v859 = vsub.f32 %v774, %v819
        %v860 = vsub.f32 %v728, %v822
        %v861 = vsub.f32 %v777, %v822
        %v862 = vsub.f32 %v730, %v825
        %v863 = vsub.f32 %v779, %v825
        %v864 = vsub.f32 %v733, %v828
        %v865 = vsub.f32 %v782, %v828
        %v866 = vsub.f32 %v735, %v831
        %v867 = vsub.f32 %v784, %v831
        %v868 = vsub.f32 %v738, %v834
        %v869 = vsub.f32 %v787, %v834
        %v870 = vsub.f32 %v740, %v837
        %v871 = vsub.f32 %v789, %v837
        %v872 = vsub.f32 %v743, %v840
        %v873 = vsub.f32 %v792, %v840
        %v874 = vsub.f32 %v745, %v843
        %v875 = vsub.f32 %v794, %v843
        %v876 = vmul.f32 %v844, 1.442695
        %v877 = vpow.pop %v876
        %v878 = vmul.f32 %v845, 1.442695
        %v879 = vpow.pop %v878
        %v880 = vmul.f32 %v846, 1.442695
        %v881 = vpow.pop %v880
        %v882 = vmul.f32 %v847, 1.442695
        %v883 = vpow.pop %v882
        %v884 = vmul.f32 %v848, 1.442695
        %v885 = vpow.pop %v884
        %v886 = vmul.f32 %v849, 1.442695
        %v887 = vpow.pop %v886
        %v888 = vmul.f32 %v850, 1.442695
        %v889 = vpow.pop %v888
        %v890 = vmul.f32 %v851, 1.442695
        %v891 = vpow.pop %v890
        %v892 = vmul.f32 %v852, 1.442695
        %v893 = vpow.pop %v892
        %v894 = vmul.f32 %v853, 1.442695
        %v895 = vpow.pop %v894
        %v896 = vmul.f32 %v854, 1.442695
        %v897 = vpow.pop %v896
        %v898 = vmul.f32 %v855, 1.442695
        %v899 = vpow.pop %v898
        %v900 = vmul.f32 %v856, 1.442695
        %v901 = vpow.pop %v900
        %v902 = vmul.f32 %v857, 1.442695
        %v903 = vpow.pop %v902
        %v904 = vmul.f32 %v858, 1.442695
        %v905 = vpow.pop %v904
        %v906 = vmul.f32 %v859, 1.442695
        %v907 = vpow.pop %v906
        %v908 = vmul.f32 %v860, 1.442695
        %v909 = vpow.pop %v908
        %v910 = vmul.f32 %v861, 1.442695
        %v911 = vpow.pop %v910
        %v912 = vmul.f32 %v862, 1.442695
        %v913 = vpow.pop %v912
        %v914 = vmul.f32 %v863, 1.442695
        %v915 = vpow.pop %v914
        %v916 = vmul.f32 %v864, 1.442695
        %v917 = vpow.pop %v916
        %v918 = vmul.f32 %v865, 1.442695
        %v919 = vpow.pop %v918
        %v920 = vmul.f32 %v866, 1.442695
        %v921 = vpow.pop %v920
        %v922 = vmul.f32 %v867, 1.442695
        %v923 = vpow.pop %v922
        %v924 = vmul.f32 %v868, 1.442695
        %v925 = vpow.pop %v924
        %v926 = vmul.f32 %v869, 1.442695
        %v927 = vpow.pop %v926
        %v928 = vmul.f32 %v870, 1.442695
        %v929 = vpow.pop %v928
        %v930 = vmul.f32 %v871, 1.442695
        %v931 = vpow.pop %v930
        %v932 = vmul.f32 %v872, 1.442695
        %v933 = vpow.pop %v932
        %v934 = vmul.f32 %v873, 1.442695
        %v935 = vpow.pop %v934
        %v936 = vmul.f32 %v874, 1.442695
        %v937 = vpow.pop %v936
        %v938 = vmul.f32 %v875, 1.442695
        %v939 = vpow.pop %v938
        %v940 = vld [vmem:[#allocation3] sm:$0xff]
        %v941 = vld [vmem:[#allocation3 + $0x8] sm:$0xff]
        %v942 = vld [vmem:[#allocation3 + $0x10] sm:$0xff]
        %v943 = vld [vmem:[#allocation3 + $0x18] sm:$0xff]
        %v944 = vpack.c.bf16 %v881, %v877
        %v945 = vpack.c.bf16 %v883, %v879
        %v946 = vpack.c.bf16 %v889, %v885
        %v947 = vpack.c.bf16 %v891, %v887
        %v948 = vpack.c.bf16 %v897, %v893
        %v949 = vpack.c.bf16 %v899, %v895
        %v950 = vpack.c.bf16 %v905, %v901
        %v951 = vpack.c.bf16 %v907, %v903
        %v952 = vpack.c.bf16 %v913, %v909
        %v953 = vpack.c.bf16 %v915, %v911
        %v954 = vpack.c.bf16 %v921, %v917
        %v955 = vpack.c.bf16 %v923, %v919
        %v956 = vpack.c.bf16 %v929, %v925
        %v957 = vpack.c.bf16 %v931, %v927
        %v958 = vpack.c.bf16 %v937, %v933
        %v959 = vpack.c.bf16 %v939, %v935
        %v964 = vunpack.c.l.b16 %v940
        %v965 = vunpack.c.h.b16 %v940
        %v966 = vunpack.c.l.b16 %v941
        %v967 = vunpack.c.h.b16 %v941
        %v968 = vunpack.c.l.b16 %v942
        %v969 = vunpack.c.h.b16 %v942
        %v970 = vunpack.c.l.b16 %v943
        %v971 = vunpack.c.h.b16 %v943
        %v972 = vpack.c.b16 %v966, %v964
        %v973 = vpack.c.b16 %v967, %v965
        %v974 = vpack.c.b16 %v970, %v968
        %v975 = vpack.c.b16 %v971, %v969
        %980 = vmatpush.bf16.xpose.msra.mxu0 %v958
        %981 = vmatpush.bf16.xpose.msra.mxu0 %v956
        %982 = vmatpush.bf16.xpose.msra.mxu0 %v954
        %983 = vmatpush.bf16.xpose.msra.mxu0 %v952
        %984 = vmatpush.bf16.xpose.msra.mxu0 %v950
        %985 = vmatpush.bf16.xpose.msra.mxu0 %v948
        %986 = vmatpush.bf16.xpose.msra.mxu0 %v946
        %987 = vmatpush.bf16.xpose.msra.mxu0 %v944
        %988 = vmatmul.bf16.gmra.mxu0 %v972
        %v989 = vpop.f32.mrf.mxu0
        %v990 = vadd.f32 0.0, %v989
        %v991 = vpop.f32.mrf.mxu0
        %v992 = vadd.f32 0.0, %v991
        %993 = vmatmul.bf16.gmra.mxu0 %v974
        %v994 = vpop.f32.mrf.mxu0
        %v995 = vadd.f32 0.0, %v994
        %v996 = vpop.f32.mrf.mxu0
        %v997 = vadd.f32 0.0, %v996
        %998 = vdwg.mxu0
        %999 = vmatpush.bf16.xpose.msra.mxu0 %v959
        %1000 = vmatpush.bf16.xpose.msra.mxu0 %v957
        %1001 = vmatpush.bf16.xpose.msra.mxu0 %v955
        %1002 = vmatpush.bf16.xpose.msra.mxu0 %v953
        %1003 = vmatpush.bf16.xpose.msra.mxu0 %v951
        %1004 = vmatpush.bf16.xpose.msra.mxu0 %v949
        %1005 = vmatpush.bf16.xpose.msra.mxu0 %v947
        %1006 = vmatpush.bf16.xpose.msra.mxu0 %v945
        %1007 = vmatmul.bf16.gmra.mxu0 %v973
        %v1008 = vpop.f32.mrf.mxu0
        %v1009 = vadd.f32 %v990, %v1008
        %v1010 = vpop.f32.mrf.mxu0
        %v1011 = vadd.f32 %v992, %v1010
        %1012 = vmatmul.bf16.gmra.mxu0 %v975
        %v1013 = vpop.f32.mrf.mxu0
        %v1014 = vadd.f32 %v995, %v1013
        %v1015 = vpop.f32.mrf.mxu0
        %v1016 = vadd.f32 %v997, %v1015
        %1017 = vdwg.mxu0
        %1018 = vmatpush.xpose.msra.mxu0 %v937
        %1019 = vmatpush.xpose.msra.mxu0 %v933
        %1020 = vmatpush.xpose.msra.mxu0 %v929
        %1021 = vmatpush.xpose.msra.mxu0 %v925
        %1022 = vmatpush.xpose.msra.mxu0 %v921
        %1023 = vmatpush.xpose.msra.mxu0 %v917
        %1024 = vmatpush.xpose.msra.mxu0 %v913
        %1025 = vmatpush.xpose.msra.mxu0 %v909
        %1026 = vmatpush.xpose.msra.mxu0 %v905
        %1027 = vmatpush.xpose.msra.mxu0 %v901
        %1028 = vmatpush.xpose.msra.mxu0 %v897
        %1029 = vmatpush.xpose.msra.mxu0 %v893
        %1030 = vmatpush.xpose.msra.mxu0 %v889
        %1031 = vmatpush.xpose.msra.mxu0 %v885
        %1032 = vmatpush.xpose.msra.mxu0 %v881
        %1033 = vmatpush.xpose.msra.mxu0 %v877
        %1034 = vmatmul.f32.gmra.mxu0 1.0
        %v1035 = vpop.f32.mrf.mxu0
        %v1036 = vadd.f32 0.0, %v1035
        %1037 = vdwg.mxu0
        %1038 = vmatpush.xpose.msra.mxu0 %v939
        %1039 = vmatpush.xpose.msra.mxu0 %v935
        %1040 = vmatpush.xpose.msra.mxu0 %v931
        %1041 = vmatpush.xpose.msra.mxu0 %v927
        %1042 = vmatpush.xpose.msra.mxu0 %v923
        %1043 = vmatpush.xpose.msra.mxu0 %v919
        %1044 = vmatpush.xpose.msra.mxu0 %v915
        %1045 = vmatpush.xpose.msra.mxu0 %v911
        %1046 = vmatpush.xpose.msra.mxu0 %v907
        %1047 = vmatpush.xpose.msra.mxu0 %v903
        %1048 = vmatpush.xpose.msra.mxu0 %v899
        %1049 = vmatpush.xpose.msra.mxu0 %v895
        %1050 = vmatpush.xpose.msra.mxu0 %v891
        %1051 = vmatpush.xpose.msra.mxu0 %v887
        %1052 = vmatpush.xpose.msra.mxu0 %v883
        %1053 = vmatpush.xpose.msra.mxu0 %v879
        %1054 = vmatmul.f32.gmra.mxu0 1.0
        %v1055 = vpop.f32.mrf.mxu0
        %v1056 = vadd.f32 %v1036, %v1055
        %1057 = vdwg.mxu0
        %v1058 = vrcp.pop %v1056
        %s1059 = sld [smem:[#allocation4]]
        %v1060 = vperm.slane %v1058, 0
        %v1061 = vmul.f32 %v1009, %v1060
        %v1062 = vmul.f32 %v1011, %v1060
        %v1063 = vmul.f32 %v1014, %v1060
        %v1064 = vmul.f32 %v1016, %v1060
        %v1065 = vstv %s1059
        %v1066 = vmul.f32 %v1065, %v1061
        %v1067 = vmul.f32 %v1065, %v1062
        %v1068 = vmul.f32 %v1065, %v1063
        %v1069 = vmul.f32 %v1065, %v1064
        %v1070 = vadd.f32 %v1066, %v585
        %v1071 = vadd.f32 %v1067, %v586
        %v1072 = vadd.f32 %v1068, %v587
        %v1073 = vadd.f32 %v1069, %v588
        %1074 = vst [vmem:[%s412] sm:$0xff] %v1070
        %1075 = vst [vmem:[%s412 + $0x8] sm:$0xff] %v1071
        %1076 = vst [vmem:[%s412 + $0x10] sm:$0xff] %v1072
        %1077 = vst [vmem:[%s412 + $0x18] sm:$0xff] %v1073
        %s1078 = sand.u32 %s253, 1
        %s1079 = scalar_lea.sflag [#allocation7], %s1078
        %s1080 = sand.u32 %s253, 1
        %s1081 = smul.addr %s1080, 32
        %s1082 = scalar_lea.vmem [#allocation10], %s1081
        // Predicated region
        $region69: #{tpu_custom_call.1} parent=55 // pred_check
          %p1083 = pneg %p263
        $region70: #{tpu_custom_call.1} parent=55 // pred_check_branch
          %1085 = sbr.rel (%p1083) target = $region72
        $region71: #{tpu_custom_call.1} parent=55 // pred_region
          %1087 = vsyncadd %s1079, 0
          %s1088 = smul.addr %s34, 8
          %s1089 = sadd.s32 %s35, %s1088
          %s1090 = smul.addr %s1089, 8
          %s1091 = scalar_lea.hbm %s9, %s1090
          %s1092 = sshll.u32 %s1082, 4
          %s1093 = int_to_ptr.vmem [resolvable:$true] %s1092
          %s1094 = sshll.u32 %s1091, 4
          %s1095 = int_to_ptr.hbm [resolvable:$true] %s1094
          %1100 = dma.vmem_to_hbm [thread:$0]  %s1093, 512, %s1095, %s1079, 128, 256, 8
        $region72: #{tpu_custom_call.1} parent=55 // pred_fallthru
          _
      $region56: #{tpu_custom_call.1} parent=5 // pred_fallthru
        _
      %p1101 = scmp.le.s32.totalorder 2, %s25
      // Predicated region
      $region73: #{tpu_custom_call.1} parent=5 // pred_check
        %p1102 = pneg %p1101
      $region74: #{tpu_custom_call.1} parent=5 // pred_check_branch
        %1104 = sbr.rel (%p1102) target = $region76
      $region75: #{tpu_custom_call.1} parent=5 // pred_region
        %s1105 = ssub.s32 %s25, 2
        // Predicated region
        $region77: #{tpu_custom_call.1} parent=75 // pred_check
          %p1106 = pneg %p269
        $region78: #{tpu_custom_call.1} parent=75 // pred_check_branch
          %1108 = sbr.rel (%p1106) target = $region80
        $region79: #{tpu_custom_call.1} parent=75 // pred_region
          %s1109 = sand.u32 %s254, 1
          %s1110 = scalar_lea.sflag [#allocation7], %s1109
          %s1111 = sand.u32 %s254, 1
          %s1112 = smul.addr %s1111, 32
          %s1113 = scalar_lea.vmem [#allocation10], %s1112
          %1115 = dma.done %s1110, 512
        $region80: #{tpu_custom_call.1} parent=75 // pred_fallthru
          _
      $region76: #{tpu_custom_call.1} parent=5 // pred_fallthru
        _
    $region6: #{tpu_custom_call.1} parent=1 // loop_footer
      %s29 = sadd.s32 1, %s25
    $region7: #{tpu_custom_call.1} parent=1 // loop_footer_branch
      %24 = sbr.rel target = $region3
    $region8: #{tpu_custom_call.1} parent=1 // loop_exit
      _
    %1116 = vsyncpa [#allocation6], 1
    %s1117 = scalar_lea.sflag [#allocation6], 1
    %1118 = vsyncpa %s1117, 1
    %1119 = vsyncpa [#allocation9], 1
    %s1120 = scalar_lea.sflag [#allocation9], 1
    %1121 = vsyncpa %s1120, 1
    %1122 = vsyncpa [#allocation7], 1
    %s1123 = scalar_lea.sflag [#allocation7], 1
    %1124 = vsyncpa %s1123, 1

</llo_original>
